<compile_context>
chip_gen: v5e
topology: v5e:2x2
jax: 0.10.0
libtpu: 0.0.40
codegen_flags: <defaults>
</compile_context>

<pallas_src>
import jax
import jax.numpy as jnp
from jax import lax
from jax.experimental import pallas as pl
from jax.experimental.pallas import tpu as pltpu

# Offset used for padded (fake) columns: diff = 1e18 -> diff^2 = 1e36 (finite,
# no inf/nan paths) -> prob ~ 1e-36, negligible in the row sum and sliced away.
_PAD_OFFSET = 1e18


def agents_layer_kernel(x_ref, at_ref, cs_ref, off_ref, out_ref):
    # x_ref:   (TB, D)  f32 VMEM   batch tile (pipelined)
    # at_ref:  (D, Np)  f32 VMEM   un-normalized agents^T (resident)
    # cs_ref:  (1, Np)  f32 VMEM   scale * 1/||agent_i||   (0 for padded cols)
    # off_ref: (1, Np)  f32 VMEM   scale for real cols, 1e18 for padded cols
    # out_ref: (TB, Np) f32 VMEM   lane-dense output tile
    simm_raw = jnp.dot(
        x_ref[...], at_ref[...],
        preferred_element_type=jnp.float32,
        precision=lax.Precision.HIGHEST,
    )                                                   # (TB, Np) MXU
    # diff == scale * (1 - simm) for real columns (normalization + scale fused).
    diff = off_ref[...] - simm_raw * cs_ref[...]
    prob = pl.reciprocal(1.0 + diff * diff, approx=False)
    denom = jnp.sum(prob, axis=1, keepdims=True)        # (TB, 1)
    out_ref[...] = prob * pl.reciprocal(denom, approx=False)


def _vmem_capacity_bytes():
    try:
        return int(pltpu.get_tpu_info().vmem_capacity_bytes)
    except Exception:
        return 64 * 1024 * 1024  # conservative (v7x-sized) fallback


def _pick_batch_tile(B, D, Np, vmem_capacity, itemsize=4):
    """Largest batch tile (multiple of 8, capped at 8192) keeping the resident
    agents/coef blocks + double-buffered x/out tiles + ~4 elementwise
    temporaries inside ~70% of per-core VMEM."""
    budget = int(0.70 * vmem_capacity)
    resident = itemsize * (D * Np + 2 * Np)              # single-buffered residents
    # per batch row: x (x2 bufs) + out (x2 bufs) + ~4 (tb,Np) f32 temporaries
    per_row = itemsize * (2 * D + 2 * Np + 4 * Np)
    avail = max(budget - resident, 8 * per_row)
    tb = max(8, (avail // per_row // 8) * 8)
    tb = min(tb, 8192)
    if B <= tb:
        return B
    return int(tb)


def agents_layer_forward(x, agents, scale_factor, block_b=None):
    B, D = x.shape
    N, D2 = agents.shape
    assert D == D2
    x = x.astype(jnp.float32)
    agents = agents.astype(jnp.float32)
    scale = jnp.float32(scale_factor)

    # ---- one-time prep, hoisted out of the kernel body ---------------------
    # F.normalize(dim=1) folded into a per-column scale on the matmul output:
    #   1 / max(||a_i||, 1e-12) == rsqrt(max(||a_i||^2, 1e-24))
    sq = jnp.sum(agents * agents, axis=1)                                # (N,)
    col_scale = (scale * lax.rsqrt(jnp.maximum(sq, 1e-24)))[None, :]     # (1, N)
    offset = jnp.full((1, N), scale, dtype=jnp.float32)                  # (1, N)
    agents_t = agents.T                                                  # (D, N)

    # Pad the column axis to a lane-dense multiple of 128.  Padded columns get
    # col_scale = 0 and offset = 1e18 so their prob is ~1e-36 (effectively 0).
    Np = max(128, ((N + 127) // 128) * 128)
    if Np != N:
        pad = Np - N
        agents_t = jnp.pad(agents_t, ((0, 0), (0, pad)))
        col_scale = jnp.pad(col_scale, ((0, 0), (0, pad)))
        offset = jnp.pad(offset, ((0, 0), (0, pad)), constant_values=_PAD_OFFSET)

    vmem_cap = _vmem_capacity_bytes()
    tb = _pick_batch_tile(B, D, Np, vmem_cap) if block_b is None else min(block_b, B)
    grid = (pl.cdiv(B, tb),)

    itemsize = 4
    # residents + pipelined x/out + elementwise temporaries
    vmem_need = itemsize * (D * Np + 2 * Np + tb * (2 * D + 6 * Np))
    vmem_limit = int(min(max(int(1.25 * vmem_need) + (4 << 20), 16 << 20),
                         int(0.85 * vmem_cap)))

    def _build(resident_buffer_count):
        pm = (pl.Buffered(resident_buffer_count)
              if resident_buffer_count is not None else None)

        def rspec(shape):
            if pm is None:
                return pl.BlockSpec(shape, lambda i: (0, 0))
            return pl.BlockSpec(shape, lambda i: (0, 0), pipeline_mode=pm)

        return pl.pallas_call(
            agents_layer_kernel,
            out_shape=jax.ShapeDtypeStruct((B, Np), jnp.float32),
            grid_spec=pltpu.PrefetchScalarGridSpec(
                num_scalar_prefetch=0,
                grid=grid,
                in_specs=[
                    pl.BlockSpec((tb, D), lambda i: (i, 0)),   # x: batch-tiled
                    rspec((D, Np)),                            # agents^T: resident
                    rspec((1, Np)),                            # col_scale: resident
                    rspec((1, Np)),                            # offset: resident
                ],
                out_specs=pl.BlockSpec((tb, Np), lambda i: (i, 0)),
            ),
            compiler_params=pltpu.CompilerParams(
                # Batch rows are independent: shard across TCs where supported.
                dimension_semantics=("parallel",),
                vmem_limit_bytes=vmem_limit,
            ),
        )

    try:
        out = _build(1)(x, agents_t, col_scale, offset)
    except Exception:
        # Fallback: default double-buffered residents (only costs VMEM).
        out = _build(None)(x, agents_t, col_scale, offset)

    return out[:, :N] if Np != N else out


def agents_layer_ref(x, agents, scale_factor):
    # Pure-JAX reference mirroring the PyTorch module exactly.
    norm = jnp.sqrt(jnp.sum(agents * agents, axis=1, keepdims=True))
    a_n = agents / jnp.maximum(norm, 1e-12)
    simm = jnp.matmul(x, a_n.T, precision=lax.Precision.HIGHEST)
    ele = (scale_factor * (1.0 - simm)) ** 2
    prob = 1.0 / (1.0 + ele)
    return prob / jnp.sum(prob, axis=1, keepdims=True)


def _check(x, agents, scale_factor, block_b=None):
    out = jax.block_until_ready(
        agents_layer_forward(x, agents, scale_factor, block_b=block_b)
    )
    ref = agents_layer_ref(x, agents, scale_factor)
    assert out.shape == ref.shape
    assert jnp.allclose(out, ref, atol=1e-5, rtol=1e-5), (
        f"max abs err {jnp.max(jnp.abs(out - ref))}"
    )
    assert jnp.allclose(jnp.sum(out, axis=1), 1.0, atol=1e-5)


if __name__ == "__main__":
    scale_factor = 10.0
    cols_repr_init_std = 0.005
    key = jax.random.PRNGKey(0)

    # Test 1: tiny shapes matching the module's defaults scaled down.
    # n_cols=16 exercises the lane-dense padding path (Np=128), single grid step.
    batch, n_cols, repr_dim = 8, 16, 32
    k1, k2, k3, k4 = jax.random.split(key, 4)
    x1 = jax.random.normal(k1, (batch, repr_dim), dtype=jnp.float32)
    agents1 = cols_repr_init_std * jax.random.normal(
        k2, (n_cols, repr_dim), dtype=jnp.float32
    )
    _check(x1, agents1, scale_factor)

    # Test 2: lane-aligned shapes with a forced small batch tile so the
    # multi-step pipelined ("parallel" batch axis) path is exercised.
    batch2, n_cols2, repr_dim2 = 64, 128, 256
    x2 = jax.random.normal(k3, (batch2, repr_dim2), dtype=jnp.float32)
    agents2 = cols_repr_init_std * jax.random.normal(
        k4, (n_cols2, repr_dim2), dtype=jnp.float32
    )
    _check(x2, agents2, scale_factor, block_b=16)

    print("KERNEL_OK")
</pallas_src>

<mosaic_0001>
module attributes {stable_mosaic.version = 11 : i64} {
  func.func @agents_layer_kernel(%arg0: i32, %arg1: memref<8x32xf32, #tpu.memory_space<vmem>>, %arg2: memref<32x128xf32, #tpu.memory_space<vmem>>, %arg3: memref<1x128xf32, #tpu.memory_space<vmem>>, %arg4: memref<1x128xf32, #tpu.memory_space<vmem>>, %arg5: memref<8x128xf32, #tpu.memory_space<vmem>>) attributes {dimension_semantics = [#tpu.dimension_semantics<parallel>], iteration_bounds = array<i64: 1>, scalar_prefetch = 0 : i64, scratch_operands = 0 : i64, tpu.core_type = #tpu.core_type<tc>, window_params = [{transform_indices = @transform_0, window_bounds = array<i64: 8, 32>}, {pipeline_mode = #tpu.pipeline_mode<synchronous>, transform_indices = @transform_1, window_bounds = array<i64: 32, 128>}, {pipeline_mode = #tpu.pipeline_mode<synchronous>, transform_indices = @transform_2, window_bounds = array<i64: 1, 128>}, {pipeline_mode = #tpu.pipeline_mode<synchronous>, transform_indices = @transform_3, window_bounds = array<i64: 1, 128>}, {transform_indices = @transform_4, window_bounds = array<i64: 8, 128>}]} {
    %c0 = arith.constant 0 : index
    %c0_0 = arith.constant 0 : index
    %0 = vector.load %arg1[%c0, %c0_0] : memref<8x32xf32, #tpu.memory_space<vmem>>, vector<8x32xf32>
    %c0_1 = arith.constant 0 : index
    %c0_2 = arith.constant 0 : index
    %1 = vector.load %arg2[%c0_1, %c0_2] : memref<32x128xf32, #tpu.memory_space<vmem>>, vector<32x128xf32>
    %cst = arith.constant dense<0.000000e+00> : vector<8x128xf32>
    %2 = tpu.matmul %0, %1, %cst {dimension_numbers = #tpu.dot_dimension_numbers<[1], [0], [0], [1], [0, 0, 1, 1], [], []>, precision = #tpu.contract_precision<fp32>} : vector<8x32xf32>, vector<32x128xf32>, vector<8x128xf32> -> vector<8x128xf32>
    %c0_3 = arith.constant 0 : index
    %c0_4 = arith.constant 0 : index
    %3 = vector.load %arg4[%c0_3, %c0_4] : memref<1x128xf32, #tpu.memory_space<vmem>>, vector<1x128xf32>
    %c0_5 = arith.constant 0 : index
    %c0_6 = arith.constant 0 : index
    %4 = vector.load %arg3[%c0_5, %c0_6] : memref<1x128xf32, #tpu.memory_space<vmem>>, vector<1x128xf32>
    %5 = vector.broadcast %4 : vector<1x128xf32> to vector<8x128xf32>
    %6 = arith.mulf %2, %5 : vector<8x128xf32>
    %7 = vector.broadcast %3 : vector<1x128xf32> to vector<8x128xf32>
    %8 = arith.subf %7, %6 : vector<8x128xf32>
    %9 = arith.mulf %8, %8 : vector<8x128xf32>
    %cst_7 = arith.constant 1.000000e+00 : f32
    %10 = vector.broadcast %cst_7 : f32 to vector<8x128xf32>
    %11 = arith.addf %10, %9 : vector<8x128xf32>
    %12 = tpu.reciprocal %11 : vector<8x128xf32> -> vector<8x128xf32>
    %cst_8 = arith.constant dense<0.000000e+00> : vector<8xf32>
    %13 = vector.multi_reduction <add>, %12, %cst_8 [1] : vector<8x128xf32> to vector<8xf32>
    %14 = vector.shape_cast %13 : vector<8xf32> to vector<8x1xf32>
    %15 = tpu.reciprocal %14 : vector<8x1xf32> -> vector<8x1xf32>
    %16 = vector.broadcast %15 : vector<8x1xf32> to vector<8x128xf32>
    %17 = arith.mulf %12, %16 : vector<8x128xf32>
    %c0_9 = arith.constant 0 : index
    %c0_10 = arith.constant 0 : index
    %18 = vector.load %arg5[%c0_9, %c0_10] : memref<8x128xf32, #tpu.memory_space<vmem>>, vector<8x128xf32>
    tpu.vector_store %arg5[%c0_9, %c0_10], %17 {strides = array<i32>} : memref<8x128xf32, #tpu.memory_space<vmem>>, vector<8x128xf32>,
    return
  }
  func.func @transform_0(%arg0: i32) -> (i32, i32) {
    %c0_i32 = arith.constant 0 : i32
    %c0_i32_0 = arith.constant 0 : i32
    return %arg0, %c0_i32 : i32, i32
  }
  func.func @transform_1(%arg0: i32) -> (i32, i32) {
    %c0_i32 = arith.constant 0 : i32
    %c0_i32_0 = arith.constant 0 : i32
    %c0_i32_1 = arith.constant 0 : i32
    return %c0_i32, %c0_i32_0 : i32, i32
  }
  func.func @transform_2(%arg0: i32) -> (i32, i32) {
    %c0_i32 = arith.constant 0 : i32
    %c0_i32_0 = arith.constant 0 : i32
    %c0_i32_1 = arith.constant 0 : i32
    return %c0_i32, %c0_i32_0 : i32, i32
  }
  func.func @transform_3(%arg0: i32) -> (i32, i32) {
    %c0_i32 = arith.constant 0 : i32
    %c0_i32_0 = arith.constant 0 : i32
    %c0_i32_1 = arith.constant 0 : i32
    return %c0_i32, %c0_i32_0 : i32, i32
  }
  func.func @transform_4(%arg0: i32) -> (i32, i32) {
    %c0_i32 = arith.constant 0 : i32
    %c0_i32_0 = arith.constant 0 : i32
    return %arg0, %c0_i32 : i32, i32
  }
}

module attributes {stable_mosaic.version = 11 : i64} {
  func.func @agents_layer_kernel(%arg0: i32, %arg1: memref<8x32xf32, #tpu.memory_space<vmem>>, %arg2: memref<32x128xf32, #tpu.memory_space<vmem>>, %arg3: memref<1x128xf32, #tpu.memory_space<vmem>>, %arg4: memref<1x128xf32, #tpu.memory_space<vmem>>, %arg5: memref<8x128xf32, #tpu.memory_space<vmem>>) attributes {dimension_semantics = [#tpu.dimension_semantics<parallel>], iteration_bounds = array<i64: 1>, scalar_prefetch = 0 : i64, scratch_operands = 0 : i64, tpu.core_type = #tpu.core_type<tc>, window_params = [{transform_indices = @transform_0, window_bounds = array<i64: 8, 32>}, {pipeline_mode = #tpu.pipeline_mode<synchronous>, transform_indices = @transform_1, window_bounds = array<i64: 32, 128>}, {pipeline_mode = #tpu.pipeline_mode<synchronous>, transform_indices = @transform_2, window_bounds = array<i64: 1, 128>}, {pipeline_mode = #tpu.pipeline_mode<synchronous>, transform_indices = @transform_3, window_bounds = array<i64: 1, 128>}, {transform_indices = @transform_4, window_bounds = array<i64: 8, 128>}]} {
    %c0 = arith.constant 0 : index
    %c0_0 = arith.constant 0 : index
    %0 = vector.load %arg1[%c0, %c0_0] : memref<8x32xf32, #tpu.memory_space<vmem>>, vector<8x32xf32>
    %c0_1 = arith.constant 0 : index
    %c0_2 = arith.constant 0 : index
    %1 = vector.load %arg2[%c0_1, %c0_2] : memref<32x128xf32, #tpu.memory_space<vmem>>, vector<32x128xf32>
    %cst = arith.constant dense<0.000000e+00> : vector<8x128xf32>
    %2 = tpu.matmul %0, %1, %cst {dimension_numbers = #tpu.dot_dimension_numbers<[1], [0], [0], [1], [0, 0, 1, 1], [], []>, precision = #tpu.contract_precision<fp32>} : vector<8x32xf32>, vector<32x128xf32>, vector<8x128xf32> -> vector<8x128xf32>
    %c0_3 = arith.constant 0 : index
    %c0_4 = arith.constant 0 : index
    %3 = vector.load %arg4[%c0_3, %c0_4] : memref<1x128xf32, #tpu.memory_space<vmem>>, vector<1x128xf32>
    %c0_5 = arith.constant 0 : index
    %c0_6 = arith.constant 0 : index
    %4 = vector.load %arg3[%c0_5, %c0_6] : memref<1x128xf32, #tpu.memory_space<vmem>>, vector<1x128xf32>
    %5 = vector.broadcast %4 : vector<1x128xf32> to vector<8x128xf32>
    %6 = arith.mulf %2, %5 : vector<8x128xf32>
    %7 = vector.broadcast %3 : vector<1x128xf32> to vector<8x128xf32>
    %8 = arith.subf %7, %6 : vector<8x128xf32>
    %9 = arith.mulf %8, %8 : vector<8x128xf32>
    %cst_7 = arith.constant 1.000000e+00 : f32
    %10 = vector.broadcast %cst_7 : f32 to vector<8x128xf32>
    %11 = arith.addf %10, %9 : vector<8x128xf32>
    %12 = tpu.reciprocal %11 : vector<8x128xf32> -> vector<8x128xf32>
    %cst_8 = arith.constant dense<0.000000e+00> : vector<8xf32>
    %13 = vector.multi_reduction <add>, %12, %cst_8 [1] : vector<8x128xf32> to vector<8xf32>
    %14 = vector.shape_cast %13 : vector<8xf32> to vector<8x1xf32>
    %15 = tpu.reciprocal %14 : vector<8x1xf32> -> vector<8x1xf32>
    %16 = vector.broadcast %15 : vector<8x1xf32> to vector<8x128xf32>
    %17 = arith.mulf %12, %16 : vector<8x128xf32>
    %c0_9 = arith.constant 0 : index
    %c0_10 = arith.constant 0 : index
    %18 = vector.load %arg5[%c0_9, %c0_10] : memref<8x128xf32, #tpu.memory_space<vmem>>, vector<8x128xf32>
    tpu.vector_store %arg5[%c0_9, %c0_10], %17 {strides = array<i32>} : memref<8x128xf32, #tpu.memory_space<vmem>>, vector<8x128xf32>,
    return
  }
  func.func @transform_0(%arg0: i32) -> (i32, i32) {
    %c0_i32 = arith.constant 0 : i32
    %c0_i32_0 = arith.constant 0 : i32
    return %arg0, %c0_i32 : i32, i32
  }
  func.func @transform_1(%arg0: i32) -> (i32, i32) {
    %c0_i32 = arith.constant 0 : i32
    %c0_i32_0 = arith.constant 0 : i32
    %c0_i32_1 = arith.constant 0 : i32
    return %c0_i32, %c0_i32_0 : i32, i32
  }
  func.func @transform_2(%arg0: i32) -> (i32, i32) {
    %c0_i32 = arith.constant 0 : i32
    %c0_i32_0 = arith.constant 0 : i32
    %c0_i32_1 = arith.constant 0 : i32
    return %c0_i32, %c0_i32_0 : i32, i32
  }
  func.func @transform_3(%arg0: i32) -> (i32, i32) {
    %c0_i32 = arith.constant 0 : i32
    %c0_i32_0 = arith.constant 0 : i32
    %c0_i32_1 = arith.constant 0 : i32
    return %c0_i32, %c0_i32_0 : i32, i32
  }
  func.func @transform_4(%arg0: i32) -> (i32, i32) {
    %c0_i32 = arith.constant 0 : i32
    %c0_i32_0 = arith.constant 0 : i32
    return %arg0, %c0_i32 : i32, i32
  }
}

</mosaic_0001>

<llo_original>
// kernel: tpu_custom_call.1
$region0: #{tpu_custom_call.1}
  #allocation0 [shape = 'u32[]', space=smem, size = 0x4, offset = 0x4, fixed_abs, tag = 'smem constant byte address 0x4 - core index']
  #allocation1 [shape = 'u32[72,128]{1,0:T(1,128)}', space=vmem, size = 0x9000, scoped, tag = 'internal scratch']
  %s0 = inlined_call_operand.hbm [shape: f32[8,32], index: 0, kind: input, shape index: {}]
  %s1 = inlined_call_operand.hbm [shape: f32[32,128], index: 1, kind: input, shape index: {}]
  %s2 = inlined_call_operand.vmem [shape: f32[1,128], index: 2, kind: input, shape index: {}]
  %s3 = inlined_call_operand.vmem [shape: f32[1,128], index: 3, kind: input, shape index: {}]
  %s4 = inlined_call_operand.hbm [shape: f32[8,128], index: 4, kind: output, shape index: {}]
  %s5 = sld [smem:[#allocation0]]
  $region34: #{tpu_custom_call.1} parent=0
    _
  %s7 = ssub.s32 1, %s5
  %s8 = scalar_select 0, %s7, %s5
  $region1: #{tpu_custom_call.1} parent=0
    #allocation2 [shape = 'u8[4096]{0}', space=vmem, size = 0x1000, scoped, tag = 'input window, operand 0, single buffered']
    #allocation3 [shape = 's32[1]{0}', space=sflag, size = 0x4, scoped, tag = 'scoped memory for tpu_custom_call.1']
    #allocation4 [shape = 's32[1]{0}', space=sflag, size = 0x4, scoped, tag = 'scoped memory for tpu_custom_call.1']
    #allocation5 [shape = 'u8[16384]{0}', space=vmem, size = 0x4000, scoped, tag = 'input window, operand 1, single buffered']
    #allocation6 [shape = 's32[1]{0}', space=sflag, size = 0x4, scoped, tag = 'scoped memory for tpu_custom_call.1']
    #allocation7 [shape = 'u8[4096]{0}', space=vmem, size = 0x1000, scoped, tag = 'output window, operand 0, single buffered']
    %9 = vsyncpa [#allocation3], 0
    %10 = vsyncpa [#allocation6], 0
    %11 = vsyncpa [#allocation4], 0
    // Predicated region
    $region2: #{tpu_custom_call.1} parent=1 // pred_check
      _
    $region3: #{tpu_custom_call.1} parent=1 // pred_check_branch
      %13 = sbr.rel (0) target = $region5
    $region4: #{tpu_custom_call.1} parent=1 // pred_region
      %15 = vsyncadd [#allocation3], 0
      %s17 = sshll.u32 %s0, 4
      %s18 = int_to_ptr.hbm [resolvable:$true] %s17
      %s19 = sshll.u32 [#allocation2], 4
      %s20 = int_to_ptr.vmem [resolvable:$true] %s19
      %22 = dma.hbm_to_vmem [thread:$0]  %s18, 128, %s20, [#allocation3]
    $region5: #{tpu_custom_call.1} parent=1 // pred_fallthru
      _
    // Predicated region
    $region6: #{tpu_custom_call.1} parent=1 // pred_check
      _
    $region7: #{tpu_custom_call.1} parent=1 // pred_check_branch
      %24 = sbr.rel (0) target = $region9
    $region8: #{tpu_custom_call.1} parent=1 // pred_region
      %26 = vsyncadd [#allocation6], 0
      %s27 = sshll.u32 %s1, 4
      %s28 = int_to_ptr.hbm [resolvable:$true] %s27
      %s29 = sshll.u32 [#allocation5], 4
      %s30 = int_to_ptr.vmem [resolvable:$true] %s29
      %35 = dma.hbm_to_vmem [thread:$0]  %s28, 512, %s30, [#allocation6], 128, 128, 8
    $region9: #{tpu_custom_call.1} parent=1 // pred_fallthru
      _
    // Predicated region
    $region10: #{tpu_custom_call.1} parent=1 // pred_check
      _
    $region11: #{tpu_custom_call.1} parent=1 // pred_check_branch
      %37 = sbr.rel (0) target = $region13
    $region12: #{tpu_custom_call.1} parent=1 // pred_region
      _
    $region13: #{tpu_custom_call.1} parent=1 // pred_fallthru
      _
    // Predicated region
    $region14: #{tpu_custom_call.1} parent=1 // pred_check
      _
    $region15: #{tpu_custom_call.1} parent=1 // pred_check_branch
      %39 = sbr.rel (0) target = $region17
    $region16: #{tpu_custom_call.1} parent=1 // pred_region
      _
    $region17: #{tpu_custom_call.1} parent=1 // pred_fallthru
      _
    // Predicated region
    $region18: #{tpu_custom_call.1} parent=1 // pred_check
      _
    $region19: #{tpu_custom_call.1} parent=1 // pred_check_branch
      %41 = sbr.rel (0) target = $region21
    $region20: #{tpu_custom_call.1} parent=1 // pred_region
      %43 = dma.done [#allocation3], 128
    $region21: #{tpu_custom_call.1} parent=1 // pred_fallthru
      _
    // Predicated region
    $region22: #{tpu_custom_call.1} parent=1 // pred_check
      _
    $region23: #{tpu_custom_call.1} parent=1 // pred_check_branch
      %45 = sbr.rel (0) target = $region25
    $region24: #{tpu_custom_call.1} parent=1 // pred_region
      %47 = dma.done [#allocation6], 512
    $region25: #{tpu_custom_call.1} parent=1 // pred_fallthru
      _
    %v48 = vld [vmem:[#allocation2] sm:$0xff]
    %v49 = vld [vmem:[#allocation5] sm:$0xff]
    %v50 = vld [vmem:[#allocation5 + $0x8] sm:$0xff]
    %v51 = vld [vmem:[#allocation5 + $0x10] sm:$0xff]
    %v52 = vld [vmem:[#allocation5 + $0x18] sm:$0xff]
    %vm53 = vcmask 261120
    %v55 = vsel %vm53, %v48, 0
    %57 = vmatpush.msra.mxu0 0.0
    %58 = vmatpush.msra.mxu0 0.0
    %59 = vmatpush.msra.mxu0 0.0
    %60 = vmatpush.msra.mxu0 0.0
    %61 = vmatpush.msra.mxu0 0.0
    %62 = vmatpush.msra.mxu0 0.0
    %63 = vmatpush.msra.mxu0 0.0
    %64 = vmatpush.msra.mxu0 0.0
    %65 = vmatpush.msra.mxu0 0.0
    %66 = vmatpush.msra.mxu0 0.0
    %67 = vmatpush.msra.mxu0 0.0
    %68 = vmatpush.msra.mxu0 0.0
    %v69 = vand.u32 %v52, 4294901760
    %70 = vmatpush.msra.mxu0 %v69
    %v71 = vand.u32 %v51, 4294901760
    %72 = vmatpush.msra.mxu0 %v71
    %v73 = vand.u32 %v50, 4294901760
    %74 = vmatpush.msra.mxu0 %v73
    %v75 = vand.u32 %v49, 4294901760
    %76 = vmatpush.msra.mxu0 %v75
    %v77 = vand.u32 %v55, 4294901760
    %v78 = vsub.f32 %v55, %v77
    %v79 = vand.u32 %v78, 4294901760
    %v80 = vsub.f32 %v78, %v79
    %v81 = vand.u32 %v80, 4294901760
    %82 = vmatmul.f32.gmra.mxu0 %v81
    %v83 = vpop.f32.mrf.mxu0
    %v84 = vadd.f32 0.0, %v83
    %85 = vdwg.mxu0
    %86 = vmatpush.msra.mxu0 0.0
    %87 = vmatpush.msra.mxu0 0.0
    %88 = vmatpush.msra.mxu0 0.0
    %89 = vmatpush.msra.mxu0 0.0
    %90 = vmatpush.msra.mxu0 0.0
    %91 = vmatpush.msra.mxu0 0.0
    %92 = vmatpush.msra.mxu0 0.0
    %93 = vmatpush.msra.mxu0 0.0
    %94 = vmatpush.msra.mxu0 0.0
    %95 = vmatpush.msra.mxu0 0.0
    %96 = vmatpush.msra.mxu0 0.0
    %97 = vmatpush.msra.mxu0 0.0
    %v98 = vand.u32 %v52, 4294901760
    %v99 = vsub.f32 %v52, %v98
    %v100 = vand.u32 %v99, 4294901760
    %v101 = vsub.f32 %v99, %v100
    %v102 = vand.u32 %v101, 4294901760
    %103 = vmatpush.msra.mxu0 %v102
    %v104 = vand.u32 %v51, 4294901760
    %v105 = vsub.f32 %v51, %v104
    %v106 = vand.u32 %v105, 4294901760
    %v107 = vsub.f32 %v105, %v106
    %v108 = vand.u32 %v107, 4294901760
    %109 = vmatpush.msra.mxu0 %v108
    %v110 = vand.u32 %v50, 4294901760
    %v111 = vsub.f32 %v50, %v110
    %v112 = vand.u32 %v111, 4294901760
    %v113 = vsub.f32 %v111, %v112
    %v114 = vand.u32 %v113, 4294901760
    %115 = vmatpush.msra.mxu0 %v114
    %v116 = vand.u32 %v49, 4294901760
    %v117 = vsub.f32 %v49, %v116
    %v118 = vand.u32 %v117, 4294901760
    %v119 = vsub.f32 %v117, %v118
    %v120 = vand.u32 %v119, 4294901760
    %121 = vmatpush.msra.mxu0 %v120
    %v122 = vand.u32 %v55, 4294901760
    %123 = vmatmul.f32.gmra.mxu0 %v122
    %v124 = vpop.f32.mrf.mxu0
    %v125 = vadd.f32 %v84, %v124
    %126 = vdwg.mxu0
    %127 = vmatpush.msra.mxu0 0.0
    %128 = vmatpush.msra.mxu0 0.0
    %129 = vmatpush.msra.mxu0 0.0
    %130 = vmatpush.msra.mxu0 0.0
    %131 = vmatpush.msra.mxu0 0.0
    %132 = vmatpush.msra.mxu0 0.0
    %133 = vmatpush.msra.mxu0 0.0
    %134 = vmatpush.msra.mxu0 0.0
    %135 = vmatpush.msra.mxu0 0.0
    %136 = vmatpush.msra.mxu0 0.0
    %137 = vmatpush.msra.mxu0 0.0
    %138 = vmatpush.msra.mxu0 0.0
    %v139 = vand.u32 %v52, 4294901760
    %v140 = vsub.f32 %v52, %v139
    %141 = vmatpush.msra.mxu0 %v140
    %v142 = vand.u32 %v51, 4294901760
    %v143 = vsub.f32 %v51, %v142
    %144 = vmatpush.msra.mxu0 %v143
    %v145 = vand.u32 %v50, 4294901760
    %v146 = vsub.f32 %v50, %v145
    %147 = vmatpush.msra.mxu0 %v146
    %v148 = vand.u32 %v49, 4294901760
    %v149 = vsub.f32 %v49, %v148
    %150 = vmatpush.msra.mxu0 %v149
    %v151 = vand.u32 %v55, 4294901760
    %v152 = vsub.f32 %v55, %v151
    %153 = vmatmul.f32.gmra.mxu0 %v152
    %v154 = vpop.f32.mrf.mxu0
    %v155 = vadd.f32 %v125, %v154
    %156 = vdwg.mxu0
    %157 = vmatpush.msra.mxu0 0.0
    %158 = vmatpush.msra.mxu0 0.0
    %159 = vmatpush.msra.mxu0 0.0
    %160 = vmatpush.msra.mxu0 0.0
    %161 = vmatpush.msra.mxu0 0.0
    %162 = vmatpush.msra.mxu0 0.0
    %163 = vmatpush.msra.mxu0 0.0
    %164 = vmatpush.msra.mxu0 0.0
    %165 = vmatpush.msra.mxu0 0.0
    %166 = vmatpush.msra.mxu0 0.0
    %167 = vmatpush.msra.mxu0 0.0
    %168 = vmatpush.msra.mxu0 0.0
    %v169 = vand.u32 %v52, 4294901760
    %170 = vmatpush.msra.mxu0 %v169
    %v171 = vand.u32 %v51, 4294901760
    %172 = vmatpush.msra.mxu0 %v171
    %v173 = vand.u32 %v50, 4294901760
    %174 = vmatpush.msra.mxu0 %v173
    %v175 = vand.u32 %v49, 4294901760
    %176 = vmatpush.msra.mxu0 %v175
    %v177 = vand.u32 %v55, 4294901760
    %v178 = vsub.f32 %v55, %v177
    %v179 = vand.u32 %v178, 4294901760
    %180 = vmatmul.f32.gmra.mxu0 %v179
    %v181 = vpop.f32.mrf.mxu0
    %v182 = vadd.f32 %v155, %v181
    %183 = vdwg.mxu0
    %184 = vmatpush.msra.mxu0 0.0
    %185 = vmatpush.msra.mxu0 0.0
    %186 = vmatpush.msra.mxu0 0.0
    %187 = vmatpush.msra.mxu0 0.0
    %188 = vmatpush.msra.mxu0 0.0
    %189 = vmatpush.msra.mxu0 0.0
    %190 = vmatpush.msra.mxu0 0.0
    %191 = vmatpush.msra.mxu0 0.0
    %192 = vmatpush.msra.mxu0 0.0
    %193 = vmatpush.msra.mxu0 0.0
    %194 = vmatpush.msra.mxu0 0.0
    %195 = vmatpush.msra.mxu0 0.0
    %v196 = vand.u32 %v52, 4294901760
    %v197 = vsub.f32 %v52, %v196
    %v198 = vand.u32 %v197, 4294901760
    %199 = vmatpush.msra.mxu0 %v198
    %v200 = vand.u32 %v51, 4294901760
    %v201 = vsub.f32 %v51, %v200
    %v202 = vand.u32 %v201, 4294901760
    %203 = vmatpush.msra.mxu0 %v202
    %v204 = vand.u32 %v50, 4294901760
    %v205 = vsub.f32 %v50, %v204
    %v206 = vand.u32 %v205, 4294901760
    %207 = vmatpush.msra.mxu0 %v206
    %v208 = vand.u32 %v49, 4294901760
    %v209 = vsub.f32 %v49, %v208
    %v210 = vand.u32 %v209, 4294901760
    %211 = vmatpush.msra.mxu0 %v210
    %v212 = vand.u32 %v55, 4294901760
    %213 = vmatmul.f32.gmra.mxu0 %v212
    %v214 = vpop.f32.mrf.mxu0
    %v215 = vadd.f32 %v182, %v214
    %216 = vdwg.mxu0
    %217 = vmatpush.msra.mxu0 0.0
    %218 = vmatpush.msra.mxu0 0.0
    %219 = vmatpush.msra.mxu0 0.0
    %220 = vmatpush.msra.mxu0 0.0
    %221 = vmatpush.msra.mxu0 0.0
    %222 = vmatpush.msra.mxu0 0.0
    %223 = vmatpush.msra.mxu0 0.0
    %224 = vmatpush.msra.mxu0 0.0
    %225 = vmatpush.msra.mxu0 0.0
    %226 = vmatpush.msra.mxu0 0.0
    %227 = vmatpush.msra.mxu0 0.0
    %228 = vmatpush.msra.mxu0 0.0
    %v229 = vand.u32 %v52, 4294901760
    %230 = vmatpush.msra.mxu0 %v229
    %v231 = vand.u32 %v51, 4294901760
    %232 = vmatpush.msra.mxu0 %v231
    %v233 = vand.u32 %v50, 4294901760
    %234 = vmatpush.msra.mxu0 %v233
    %v235 = vand.u32 %v49, 4294901760
    %236 = vmatpush.msra.mxu0 %v235
    %v237 = vand.u32 %v55, 4294901760
    %238 = vmatmul.f32.gmra.mxu0 %v237
    %v239 = vpop.f32.mrf.mxu0
    %v240 = vadd.f32 %v215, %v239
    %241 = vdwg.mxu0
    %v242 = vld [vmem:[%s3] sm:$0x1]
    %v243 = vld [vmem:[%s2] sm:$0x1]
    %v245 = vperm.slane %v243, 0
    %v247 = vmul.f32 %v240, %v245
    %v249 = vperm.slane %v242, 0
    %v251 = vsub.f32 %v249, %v247
    %v252 = vmul.f32 %v251, %v251
    %v253 = vadd.f32 %v252, 1.0
    %v254 = vrcp.pop %v253
    %v255 = vmul.f32 %v253, %v254
    %v256 = vsub.f32 1.0, %v255
    %v257 = vmul.f32 %v254, %v256
    %v258 = vadd.f32 %v254, %v257
    %vm259 = vweird.f32 %v253
    %vm260 = vweird.f32 %v254
    %vm261 = vmor %vm259, %vm260
    %v262 = vsel %vm261, %v254, %v258
    %v263 = vand.u32 2147483647, %v253
    %vm264 = vcmp.eq.f32.partialorder %v263, 8.507059e+37
    %v265 = vand.u32 %v253, 2147483648
    %v266 = vor.u32 1.1754944e-38, %v265
    %v267 = vsel %vm264, %v266, %v262
    %268 = vadd.xlane.f32.xlu0 %v267
    %v269 = vpop.xlane.xlu0 %268
    %v270 = vrcp.pop %v269
    %v271 = vmul.f32 %v269, %v270
    %v272 = vsub.f32 1.0, %v271
    %v273 = vmul.f32 %v270, %v272
    %v274 = vadd.f32 %v270, %v273
    %vm275 = vweird.f32 %v269
    %vm276 = vweird.f32 %v270
    %vm277 = vmor %vm275, %vm276
    %v278 = vsel %vm277, %v270, %v274
    %v279 = vand.u32 2147483647, %v269
    %vm280 = vcmp.eq.f32.partialorder %v279, 8.507059e+37
    %v281 = vand.u32 %v269, 2147483648
    %v282 = vor.u32 1.1754944e-38, %v281
    %v283 = vsel %vm280, %v282, %v278
    %v284 = vmul.f32 %v267, %v283
    %285 = vst [vmem:[#allocation7] sm:$0xff] %v284
    // Predicated region
    $region26: #{tpu_custom_call.1} parent=1 // pred_check
      _
    $region27: #{tpu_custom_call.1} parent=1 // pred_check_branch
      %287 = sbr.rel (0) target = $region29
    $region28: #{tpu_custom_call.1} parent=1 // pred_region
      %289 = vsyncadd [#allocation4], 0
      %s291 = sshll.u32 [#allocation7], 4
      %s292 = int_to_ptr.vmem [resolvable:$true] %s291
      %s293 = sshll.u32 %s4, 4
      %s294 = int_to_ptr.hbm [resolvable:$true] %s293
      %296 = dma.vmem_to_hbm [thread:$0]  %s292, 128, %s294, [#allocation4]
    $region29: #{tpu_custom_call.1} parent=1 // pred_fallthru
      _
    // Predicated region
    $region30: #{tpu_custom_call.1} parent=1 // pred_check
      _
    $region31: #{tpu_custom_call.1} parent=1 // pred_check_branch
      %298 = sbr.rel (0) target = $region33
    $region32: #{tpu_custom_call.1} parent=1 // pred_region
      %300 = dma.done [#allocation4], 128
    $region33: #{tpu_custom_call.1} parent=1 // pred_fallthru
      _
    %301 = vsyncpa [#allocation3], 1
    %302 = vsyncpa [#allocation6], 1
    %303 = vsyncpa [#allocation4], 1

// kernel: tpu_custom_call.1
$region0: #{tpu_custom_call.1}
  #allocation0 [shape = 'u32[]', space=smem, size = 0x4, offset = 0x4, fixed_abs, tag = 'smem constant byte address 0x4 - core index']
  #allocation1 [shape = 'u32[72,128]{1,0:T(1,128)}', space=vmem, size = 0x9000, scoped, tag = 'internal scratch']
  %s0 = inlined_call_operand.hbm [shape: f32[8,32], index: 0, kind: input, shape index: {}]
  %s1 = inlined_call_operand.hbm [shape: f32[32,128], index: 1, kind: input, shape index: {}]
  %s2 = inlined_call_operand.vmem [shape: f32[1,128], index: 2, kind: input, shape index: {}]
  %s3 = inlined_call_operand.vmem [shape: f32[1,128], index: 3, kind: input, shape index: {}]
  %s4 = inlined_call_operand.hbm [shape: f32[8,128], index: 4, kind: output, shape index: {}]
  %s5 = sld [smem:[#allocation0]]
  $region34: #{tpu_custom_call.1} parent=0
    _
  %s7 = ssub.s32 1, %s5
  %s8 = scalar_select 0, %s7, %s5
  $region1: #{tpu_custom_call.1} parent=0
    #allocation2 [shape = 'u8[4096]{0}', space=vmem, size = 0x1000, scoped, tag = 'input window, operand 0, single buffered']
    #allocation3 [shape = 's32[1]{0}', space=sflag, size = 0x4, scoped, tag = 'scoped memory for tpu_custom_call.1']
    #allocation4 [shape = 's32[1]{0}', space=sflag, size = 0x4, scoped, tag = 'scoped memory for tpu_custom_call.1']
    #allocation5 [shape = 'u8[16384]{0}', space=vmem, size = 0x4000, scoped, tag = 'input window, operand 1, single buffered']
    #allocation6 [shape = 's32[1]{0}', space=sflag, size = 0x4, scoped, tag = 'scoped memory for tpu_custom_call.1']
    #allocation7 [shape = 'u8[4096]{0}', space=vmem, size = 0x1000, scoped, tag = 'output window, operand 0, single buffered']
    %9 = vsyncpa [#allocation3], 0
    %10 = vsyncpa [#allocation6], 0
    %11 = vsyncpa [#allocation4], 0
    // Predicated region
    $region2: #{tpu_custom_call.1} parent=1 // pred_check
      _
    $region3: #{tpu_custom_call.1} parent=1 // pred_check_branch
      %13 = sbr.rel (0) target = $region5
    $region4: #{tpu_custom_call.1} parent=1 // pred_region
      %15 = vsyncadd [#allocation3], 0
      %s17 = sshll.u32 %s0, 4
      %s18 = int_to_ptr.hbm [resolvable:$true] %s17
      %s19 = sshll.u32 [#allocation2], 4
      %s20 = int_to_ptr.vmem [resolvable:$true] %s19
      %22 = dma.hbm_to_vmem [thread:$0]  %s18, 128, %s20, [#allocation3]
    $region5: #{tpu_custom_call.1} parent=1 // pred_fallthru
      _
    // Predicated region
    $region6: #{tpu_custom_call.1} parent=1 // pred_check
      _
    $region7: #{tpu_custom_call.1} parent=1 // pred_check_branch
      %24 = sbr.rel (0) target = $region9
    $region8: #{tpu_custom_call.1} parent=1 // pred_region
      %26 = vsyncadd [#allocation6], 0
      %s27 = sshll.u32 %s1, 4
      %s28 = int_to_ptr.hbm [resolvable:$true] %s27
      %s29 = sshll.u32 [#allocation5], 4
      %s30 = int_to_ptr.vmem [resolvable:$true] %s29
      %35 = dma.hbm_to_vmem [thread:$0]  %s28, 512, %s30, [#allocation6], 128, 128, 8
    $region9: #{tpu_custom_call.1} parent=1 // pred_fallthru
      _
    // Predicated region
    $region10: #{tpu_custom_call.1} parent=1 // pred_check
      _
    $region11: #{tpu_custom_call.1} parent=1 // pred_check_branch
      %37 = sbr.rel (0) target = $region13
    $region12: #{tpu_custom_call.1} parent=1 // pred_region
      _
    $region13: #{tpu_custom_call.1} parent=1 // pred_fallthru
      _
    // Predicated region
    $region14: #{tpu_custom_call.1} parent=1 // pred_check
      _
    $region15: #{tpu_custom_call.1} parent=1 // pred_check_branch
      %39 = sbr.rel (0) target = $region17
    $region16: #{tpu_custom_call.1} parent=1 // pred_region
      _
    $region17: #{tpu_custom_call.1} parent=1 // pred_fallthru
      _
    // Predicated region
    $region18: #{tpu_custom_call.1} parent=1 // pred_check
      _
    $region19: #{tpu_custom_call.1} parent=1 // pred_check_branch
      %41 = sbr.rel (0) target = $region21
    $region20: #{tpu_custom_call.1} parent=1 // pred_region
      %43 = dma.done [#allocation3], 128
    $region21: #{tpu_custom_call.1} parent=1 // pred_fallthru
      _
    // Predicated region
    $region22: #{tpu_custom_call.1} parent=1 // pred_check
      _
    $region23: #{tpu_custom_call.1} parent=1 // pred_check_branch
      %45 = sbr.rel (0) target = $region25
    $region24: #{tpu_custom_call.1} parent=1 // pred_region
      %47 = dma.done [#allocation6], 512
    $region25: #{tpu_custom_call.1} parent=1 // pred_fallthru
      _
    %v48 = vld [vmem:[#allocation2] sm:$0xff]
    %v49 = vld [vmem:[#allocation5] sm:$0xff]
    %v50 = vld [vmem:[#allocation5 + $0x8] sm:$0xff]
    %v51 = vld [vmem:[#allocation5 + $0x10] sm:$0xff]
    %v52 = vld [vmem:[#allocation5 + $0x18] sm:$0xff]
    %vm53 = vcmask 261120
    %v55 = vsel %vm53, %v48, 0
    %57 = vmatpush.msra.mxu0 0.0
    %58 = vmatpush.msra.mxu0 0.0
    %59 = vmatpush.msra.mxu0 0.0
    %60 = vmatpush.msra.mxu0 0.0
    %61 = vmatpush.msra.mxu0 0.0
    %62 = vmatpush.msra.mxu0 0.0
    %63 = vmatpush.msra.mxu0 0.0
    %64 = vmatpush.msra.mxu0 0.0
    %65 = vmatpush.msra.mxu0 0.0
    %66 = vmatpush.msra.mxu0 0.0
    %67 = vmatpush.msra.mxu0 0.0
    %68 = vmatpush.msra.mxu0 0.0
    %v69 = vand.u32 %v52, 4294901760
    %70 = vmatpush.msra.mxu0 %v69
    %v71 = vand.u32 %v51, 4294901760
    %72 = vmatpush.msra.mxu0 %v71
    %v73 = vand.u32 %v50, 4294901760
    %74 = vmatpush.msra.mxu0 %v73
    %v75 = vand.u32 %v49, 4294901760
    %76 = vmatpush.msra.mxu0 %v75
    %v77 = vand.u32 %v55, 4294901760
    %v78 = vsub.f32 %v55, %v77
    %v79 = vand.u32 %v78, 4294901760
    %v80 = vsub.f32 %v78, %v79
    %v81 = vand.u32 %v80, 4294901760
    %82 = vmatmul.f32.gmra.mxu0 %v81
    %v83 = vpop.f32.mrf.mxu0
    %v84 = vadd.f32 0.0, %v83
    %85 = vdwg.mxu0
    %86 = vmatpush.msra.mxu0 0.0
    %87 = vmatpush.msra.mxu0 0.0
    %88 = vmatpush.msra.mxu0 0.0
    %89 = vmatpush.msra.mxu0 0.0
    %90 = vmatpush.msra.mxu0 0.0
    %91 = vmatpush.msra.mxu0 0.0
    %92 = vmatpush.msra.mxu0 0.0
    %93 = vmatpush.msra.mxu0 0.0
    %94 = vmatpush.msra.mxu0 0.0
    %95 = vmatpush.msra.mxu0 0.0
    %96 = vmatpush.msra.mxu0 0.0
    %97 = vmatpush.msra.mxu0 0.0
    %v98 = vand.u32 %v52, 4294901760
    %v99 = vsub.f32 %v52, %v98
    %v100 = vand.u32 %v99, 4294901760
    %v101 = vsub.f32 %v99, %v100
    %v102 = vand.u32 %v101, 4294901760
    %103 = vmatpush.msra.mxu0 %v102
    %v104 = vand.u32 %v51, 4294901760
    %v105 = vsub.f32 %v51, %v104
    %v106 = vand.u32 %v105, 4294901760
    %v107 = vsub.f32 %v105, %v106
    %v108 = vand.u32 %v107, 4294901760
    %109 = vmatpush.msra.mxu0 %v108
    %v110 = vand.u32 %v50, 4294901760
    %v111 = vsub.f32 %v50, %v110
    %v112 = vand.u32 %v111, 4294901760
    %v113 = vsub.f32 %v111, %v112
    %v114 = vand.u32 %v113, 4294901760
    %115 = vmatpush.msra.mxu0 %v114
    %v116 = vand.u32 %v49, 4294901760
    %v117 = vsub.f32 %v49, %v116
    %v118 = vand.u32 %v117, 4294901760
    %v119 = vsub.f32 %v117, %v118
    %v120 = vand.u32 %v119, 4294901760
    %121 = vmatpush.msra.mxu0 %v120
    %v122 = vand.u32 %v55, 4294901760
    %123 = vmatmul.f32.gmra.mxu0 %v122
    %v124 = vpop.f32.mrf.mxu0
    %v125 = vadd.f32 %v84, %v124
    %126 = vdwg.mxu0
    %127 = vmatpush.msra.mxu0 0.0
    %128 = vmatpush.msra.mxu0 0.0
    %129 = vmatpush.msra.mxu0 0.0
    %130 = vmatpush.msra.mxu0 0.0
    %131 = vmatpush.msra.mxu0 0.0
    %132 = vmatpush.msra.mxu0 0.0
    %133 = vmatpush.msra.mxu0 0.0
    %134 = vmatpush.msra.mxu0 0.0
    %135 = vmatpush.msra.mxu0 0.0
    %136 = vmatpush.msra.mxu0 0.0
    %137 = vmatpush.msra.mxu0 0.0
    %138 = vmatpush.msra.mxu0 0.0
    %v139 = vand.u32 %v52, 4294901760
    %v140 = vsub.f32 %v52, %v139
    %141 = vmatpush.msra.mxu0 %v140
    %v142 = vand.u32 %v51, 4294901760
    %v143 = vsub.f32 %v51, %v142
    %144 = vmatpush.msra.mxu0 %v143
    %v145 = vand.u32 %v50, 4294901760
    %v146 = vsub.f32 %v50, %v145
    %147 = vmatpush.msra.mxu0 %v146
    %v148 = vand.u32 %v49, 4294901760
    %v149 = vsub.f32 %v49, %v148
    %150 = vmatpush.msra.mxu0 %v149
    %v151 = vand.u32 %v55, 4294901760
    %v152 = vsub.f32 %v55, %v151
    %153 = vmatmul.f32.gmra.mxu0 %v152
    %v154 = vpop.f32.mrf.mxu0
    %v155 = vadd.f32 %v125, %v154
    %156 = vdwg.mxu0
    %157 = vmatpush.msra.mxu0 0.0
    %158 = vmatpush.msra.mxu0 0.0
    %159 = vmatpush.msra.mxu0 0.0
    %160 = vmatpush.msra.mxu0 0.0
    %161 = vmatpush.msra.mxu0 0.0
    %162 = vmatpush.msra.mxu0 0.0
    %163 = vmatpush.msra.mxu0 0.0
    %164 = vmatpush.msra.mxu0 0.0
    %165 = vmatpush.msra.mxu0 0.0
    %166 = vmatpush.msra.mxu0 0.0
    %167 = vmatpush.msra.mxu0 0.0
    %168 = vmatpush.msra.mxu0 0.0
    %v169 = vand.u32 %v52, 4294901760
    %170 = vmatpush.msra.mxu0 %v169
    %v171 = vand.u32 %v51, 4294901760
    %172 = vmatpush.msra.mxu0 %v171
    %v173 = vand.u32 %v50, 4294901760
    %174 = vmatpush.msra.mxu0 %v173
    %v175 = vand.u32 %v49, 4294901760
    %176 = vmatpush.msra.mxu0 %v175
    %v177 = vand.u32 %v55, 4294901760
    %v178 = vsub.f32 %v55, %v177
    %v179 = vand.u32 %v178, 4294901760
    %180 = vmatmul.f32.gmra.mxu0 %v179
    %v181 = vpop.f32.mrf.mxu0
    %v182 = vadd.f32 %v155, %v181
    %183 = vdwg.mxu0
    %184 = vmatpush.msra.mxu0 0.0
    %185 = vmatpush.msra.mxu0 0.0
    %186 = vmatpush.msra.mxu0 0.0
    %187 = vmatpush.msra.mxu0 0.0
    %188 = vmatpush.msra.mxu0 0.0
    %189 = vmatpush.msra.mxu0 0.0
    %190 = vmatpush.msra.mxu0 0.0
    %191 = vmatpush.msra.mxu0 0.0
    %192 = vmatpush.msra.mxu0 0.0
    %193 = vmatpush.msra.mxu0 0.0
    %194 = vmatpush.msra.mxu0 0.0
    %195 = vmatpush.msra.mxu0 0.0
    %v196 = vand.u32 %v52, 4294901760
    %v197 = vsub.f32 %v52, %v196
    %v198 = vand.u32 %v197, 4294901760
    %199 = vmatpush.msra.mxu0 %v198
    %v200 = vand.u32 %v51, 4294901760
    %v201 = vsub.f32 %v51, %v200
    %v202 = vand.u32 %v201, 4294901760
    %203 = vmatpush.msra.mxu0 %v202
    %v204 = vand.u32 %v50, 4294901760
    %v205 = vsub.f32 %v50, %v204
    %v206 = vand.u32 %v205, 4294901760
    %207 = vmatpush.msra.mxu0 %v206
    %v208 = vand.u32 %v49, 4294901760
    %v209 = vsub.f32 %v49, %v208
    %v210 = vand.u32 %v209, 4294901760
    %211 = vmatpush.msra.mxu0 %v210
    %v212 = vand.u32 %v55, 4294901760
    %213 = vmatmul.f32.gmra.mxu0 %v212
    %v214 = vpop.f32.mrf.mxu0
    %v215 = vadd.f32 %v182, %v214
    %216 = vdwg.mxu0
    %217 = vmatpush.msra.mxu0 0.0
    %218 = vmatpush.msra.mxu0 0.0
    %219 = vmatpush.msra.mxu0 0.0
    %220 = vmatpush.msra.mxu0 0.0
    %221 = vmatpush.msra.mxu0 0.0
    %222 = vmatpush.msra.mxu0 0.0
    %223 = vmatpush.msra.mxu0 0.0
    %224 = vmatpush.msra.mxu0 0.0
    %225 = vmatpush.msra.mxu0 0.0
    %226 = vmatpush.msra.mxu0 0.0
    %227 = vmatpush.msra.mxu0 0.0
    %228 = vmatpush.msra.mxu0 0.0
    %v229 = vand.u32 %v52, 4294901760
    %230 = vmatpush.msra.mxu0 %v229
    %v231 = vand.u32 %v51, 4294901760
    %232 = vmatpush.msra.mxu0 %v231
    %v233 = vand.u32 %v50, 4294901760
    %234 = vmatpush.msra.mxu0 %v233
    %v235 = vand.u32 %v49, 4294901760
    %236 = vmatpush.msra.mxu0 %v235
    %v237 = vand.u32 %v55, 4294901760
    %238 = vmatmul.f32.gmra.mxu0 %v237
    %v239 = vpop.f32.mrf.mxu0
    %v240 = vadd.f32 %v215, %v239
    %241 = vdwg.mxu0
    %v242 = vld [vmem:[%s3] sm:$0x1]
    %v243 = vld [vmem:[%s2] sm:$0x1]
    %v245 = vperm.slane %v243, 0
    %v247 = vmul.f32 %v240, %v245
    %v249 = vperm.slane %v242, 0
    %v251 = vsub.f32 %v249, %v247
    %v252 = vmul.f32 %v251, %v251
    %v253 = vadd.f32 %v252, 1.0
    %v254 = vrcp.pop %v253
    %v255 = vmul.f32 %v253, %v254
    %v256 = vsub.f32 1.0, %v255
    %v257 = vmul.f32 %v254, %v256
    %v258 = vadd.f32 %v254, %v257
    %vm259 = vweird.f32 %v253
    %vm260 = vweird.f32 %v254
    %vm261 = vmor %vm259, %vm260
    %v262 = vsel %vm261, %v254, %v258
    %v263 = vand.u32 2147483647, %v253
    %vm264 = vcmp.eq.f32.partialorder %v263, 8.507059e+37
    %v265 = vand.u32 %v253, 2147483648
    %v266 = vor.u32 1.1754944e-38, %v265
    %v267 = vsel %vm264, %v266, %v262
    %268 = vadd.xlane.f32.xlu0 %v267
    %v269 = vpop.xlane.xlu0 %268
    %v270 = vrcp.pop %v269
    %v271 = vmul.f32 %v269, %v270
    %v272 = vsub.f32 1.0, %v271
    %v273 = vmul.f32 %v270, %v272
    %v274 = vadd.f32 %v270, %v273
    %vm275 = vweird.f32 %v269
    %vm276 = vweird.f32 %v270
    %vm277 = vmor %vm275, %vm276
    %v278 = vsel %vm277, %v270, %v274
    %v279 = vand.u32 2147483647, %v269
    %vm280 = vcmp.eq.f32.partialorder %v279, 8.507059e+37
    %v281 = vand.u32 %v269, 2147483648
    %v282 = vor.u32 1.1754944e-38, %v281
    %v283 = vsel %vm280, %v282, %v278
    %v284 = vmul.f32 %v267, %v283
    %285 = vst [vmem:[#allocation7] sm:$0xff] %v284
    // Predicated region
    $region26: #{tpu_custom_call.1} parent=1 // pred_check
      _
    $region27: #{tpu_custom_call.1} parent=1 // pred_check_branch
      %287 = sbr.rel (0) target = $region29
    $region28: #{tpu_custom_call.1} parent=1 // pred_region
      %289 = vsyncadd [#allocation4], 0
      %s291 = sshll.u32 [#allocation7], 4
      %s292 = int_to_ptr.vmem [resolvable:$true] %s291
      %s293 = sshll.u32 %s4, 4
      %s294 = int_to_ptr.hbm [resolvable:$true] %s293
      %296 = dma.vmem_to_hbm [thread:$0]  %s292, 128, %s294, [#allocation4]
    $region29: #{tpu_custom_call.1} parent=1 // pred_fallthru
      _
    // Predicated region
    $region30: #{tpu_custom_call.1} parent=1 // pred_check
      _
    $region31: #{tpu_custom_call.1} parent=1 // pred_check_branch
      %298 = sbr.rel (0) target = $region33
    $region32: #{tpu_custom_call.1} parent=1 // pred_region
      %300 = dma.done [#allocation4], 128
    $region33: #{tpu_custom_call.1} parent=1 // pred_fallthru
      _
    %301 = vsyncpa [#allocation3], 1
    %302 = vsyncpa [#allocation6], 1
    %303 = vsyncpa [#allocation4], 1

</llo_original>
